<compile_context>
chip_gen: v7x
topology: tpu7x:2x2x1
jax: 0.10.0
libtpu: 0.0.40
codegen_flags: <defaults>
</compile_context>

<pallas_src>
import jax
import jax.numpy as jnp
from jax.experimental import pallas as pl
from jax.experimental.pallas import tpu as pltpu


def _round_up(x: int, m: int) -> int:
    return (x + m - 1) // m * m


def _caum_category_kernel(idx_ref, fused_ref, b_ref, out_ref):
    # idx_ref   : (TN, 1)  int32  VMEM   flattened category ids (tile)
    # fused_ref : (V, O)   bf16   VMEM   embedding_table @ W^T (row 0 == 0)
    # b_ref     : (1, O)   f32    VMEM   linear bias
    # out_ref   : (TN, O)  f32/bf16 VMEM
    idx = idx_ref[...]                                        # (TN, 1)
    tn = idx.shape[0]
    v = fused_ref.shape[0]

    # One-hot gather fused with the linear layer on the MXU:
    #   relu(one_hot(idx, V) @ (table @ W^T) + b)
    col = jax.lax.broadcasted_iota(jnp.int32, (tn, v), 1)     # (TN, V)
    onehot = (col == idx).astype(fused_ref.dtype)             # exact 0/1 in bf16
    acc = jnp.dot(onehot, fused_ref[...],
                  preferred_element_type=jnp.float32)         # (TN, O) f32 acc
    out_ref[...] = jnp.maximum(acc + b_ref[...], 0.0).astype(out_ref.dtype)


def caum_category_encoder(category: jax.Array,
                          embedding_table: jax.Array,
                          w_t: jax.Array,
                          bias: jax.Array,
                          *,
                          tile_n: int = 1024,
                          out_dtype=jnp.float32) -> jax.Array:
    """Eval-mode CAUMCategoryEncoder forward.

    category:        int array of arbitrary shape.
    embedding_table: (V, D) f32, row 0 zeroed (padding_idx=0).
    w_t:             (D, O) f32  (PyTorch nn.Linear weight transposed).
    bias:            (O,)  f32.
    Returns category.shape + (O,) in `out_dtype` (use bf16 on v5e if the
    consumer accepts it; the output writeback is the roofline there).
    """
    orig_shape = category.shape
    idx = category.reshape(-1).astype(jnp.int32)
    n = idx.shape[0]
    v, d = embedding_table.shape
    o = w_t.shape[1]

    # --- Algebraic fusion (valid because dropout is identity in eval mode) ---
    # relu((onehot @ table) @ W^T + b) == relu(onehot @ (table @ W^T) + b)
    fused = jnp.dot(embedding_table, w_t,
                    preferred_element_type=jnp.float32)        # (V, O) f32

    # Lane-dense output: pad O up to a multiple of 128, slice after the call.
    o_pad = _round_up(o, 128)
    if o_pad != o:
        fused = jnp.pad(fused, ((0, 0), (0, o_pad - o)))
        bias = jnp.pad(bias, (0, o_pad - o))
    fused = fused.astype(jnp.bfloat16)                         # bf16 MXU operand
    b2 = bias.reshape(1, o_pad).astype(jnp.float32)

    # --- Tile the flattened token axis N ---
    n8 = _round_up(max(n, 1), 8)
    tn = max(8, min(tile_n, n8))
    # Keep >= 2 grid steps when there is real work (v7x: 2 TCs share the grid).
    if tn == n8 and n8 >= 512:
        tn = _round_up(pl.cdiv(n8, 2), 8)
    n_pad = _round_up(n, tn)
    idx = jnp.pad(idx, (0, n_pad - n)).reshape(n_pad, 1)       # pad ids -> row 0

    grid = (n_pad // tn,)

    out_itemsize = jnp.dtype(out_dtype).itemsize
    # Footprint: double-buffered idx + output tiles, resident fused table + bias
    # (counted double-buffered to be conservative).
    vmem_est = (2 * tn * 4
                + 2 * v * o_pad * 2
                + 2 * o_pad * 4
                + 2 * tn * o_pad * out_itemsize)
    vmem_limit = int(min(max(2 * vmem_est, 32 * 2**20), 64 * 2**20))

    cost = pl.CostEstimate(
        flops=2 * n_pad * v * o_pad,
        transcendentals=0,
        bytes_accessed=(4 * n_pad + 2 * v * o_pad + 4 * o_pad
                        + out_itemsize * n_pad * o_pad),
    )

    out = pl.pallas_call(
        _caum_category_kernel,
        out_shape=jax.ShapeDtypeStruct((n_pad, o_pad), out_dtype),
        grid=grid,
        in_specs=[
            pl.BlockSpec((tn, 1), lambda i: (i, 0)),        # ids: tiled over N
            pl.BlockSpec((v, o_pad), lambda i: (0, 0)),     # fused table: resident
            pl.BlockSpec((1, o_pad), lambda i: (0, 0)),     # bias: resident
        ],
        out_specs=pl.BlockSpec((tn, o_pad), lambda i: (i, 0)),
        compiler_params=pltpu.CompilerParams(
            dimension_semantics=("parallel",),
            vmem_limit_bytes=vmem_limit,
        ),
        cost_estimate=cost,
    )(idx, fused, b2)

    return out[:n, :o].reshape(*orig_shape, o)


def init_params(key, num_categories: int, embedding_dim: int, output_dim: int):
    k_tab, k_w, k_b = jax.random.split(key, 3)
    # nn.Embedding default init N(0,1); padding_idx=0 row zeroed.
    table = jax.random.normal(k_tab, (num_categories, embedding_dim), jnp.float32)
    table = table.at[0].set(0.0)
    # nn.Linear-like small init; kernel consumes the transposed weight (D, O).
    w_t = jax.random.normal(k_w, (embedding_dim, output_dim), jnp.float32) * 0.05
    bias = jax.random.normal(k_b, (output_dim,), jnp.float32) * 0.05
    return table, w_t, bias


if __name__ == "__main__":
    key = jax.random.PRNGKey(0)
    k_params, k_idx = jax.random.split(key)

    num_categories = 32
    embedding_dim = 128
    output_dim = 200        # deliberately NOT a multiple of 128: exercises O padding
    batch, seq = 2, 16

    table, w_t, bias = init_params(k_params, num_categories, embedding_dim, output_dim)

    category = jax.random.randint(k_idx, (batch, seq), 0, num_categories, dtype=jnp.int32)
    category = category.at[0, 0].set(0)   # exercise the padding row

    out = caum_category_encoder(category, table, w_t, bias)
    out = jax.block_until_ready(out)
    assert out.shape == (batch, seq, output_dim)

    # Tight check: same bf16-fused path computed in plain JAX (the one-hot
    # gather + f32 accumulation in the kernel are exact for bf16 operands).
    fused_bf16 = jnp.dot(table, w_t,
                         preferred_element_type=jnp.float32).astype(jnp.bfloat16)
    ref_bf16 = jnp.maximum(
        jnp.take(fused_bf16.astype(jnp.float32), category, axis=0) + bias, 0.0)
    assert jnp.allclose(out, ref_bf16, atol=1e-5, rtol=1e-5), "mismatch vs bf16-path ref"

    # Loose check vs the full-f32 PyTorch-equivalent forward (eval mode).
    emb_ref = jnp.take(table, category, axis=0)                 # nn.Embedding
    ref = jnp.maximum(emb_ref @ w_t + bias, 0.0)                # relu(linear(.))
    assert jnp.allclose(out, ref, atol=2e-2, rtol=2e-2), "mismatch vs f32 reference"

    print("KERNEL_OK")
</pallas_src>

<mosaic_0001>
module attributes {stable_mosaic.version = 11 : i64} {
  func.func @_caum_category_kernel(%arg0: i32, %arg1: memref<32x1xi32, #tpu.memory_space<vmem>>, %arg2: memref<32x256xbf16, #tpu.memory_space<vmem>>, %arg3: memref<1x256xf32, #tpu.memory_space<vmem>>, %arg4: memref<32x256xf32, #tpu.memory_space<vmem>>) attributes {dimension_semantics = [#tpu.dimension_semantics<parallel>], iteration_bounds = array<i64: 1>, scalar_prefetch = 0 : i64, scratch_operands = 0 : i64, tpu.core_type = #tpu.core_type<tc>, window_params = [{transform_indices = @transform_0, window_bounds = array<i64: 32, 1>}, {pipeline_mode = #tpu.pipeline_mode<synchronous>, transform_indices = @transform_1, window_bounds = array<i64: 32, 256>}, {pipeline_mode = #tpu.pipeline_mode<synchronous>, transform_indices = @transform_2, window_bounds = array<i64: 1, 256>}, {transform_indices = @transform_3, window_bounds = array<i64: 32, 256>}]} {
    %c0 = arith.constant 0 : index
    %c0_0 = arith.constant 0 : index
    %0 = vector.load %arg1[%c0, %c0_0] : memref<32x1xi32, #tpu.memory_space<vmem>>, vector<32x1xi32>
    %1 = tpu.iota {dimensions = array<i32: 1>} : vector<32x32xi32>
    %2 = vector.broadcast %0 : vector<32x1xi32> to vector<32x32xi32>
    %3 = arith.cmpi eq, %1, %2 : vector<32x32xi32>
    %4 = arith.extui %3 : vector<32x32xi1> to vector<32x32xi32>
    %5 = arith.sitofp %4 : vector<32x32xi32> to vector<32x32xf32>
    %6 = arith.truncf %5 : vector<32x32xf32> to vector<32x32xbf16>
    %c0_1 = arith.constant 0 : index
    %c0_2 = arith.constant 0 : index
    %7 = vector.load %arg2[%c0_1, %c0_2] : memref<32x256xbf16, #tpu.memory_space<vmem>>, vector<32x256xbf16>
    %cst = arith.constant dense<0.000000e+00> : vector<32x256xf32>
    %8 = tpu.matmul %6, %7, %cst {dimension_numbers = #tpu.dot_dimension_numbers<[1], [0], [0], [1], [0, 0, 1, 1], [], []>} : vector<32x32xbf16>, vector<32x256xbf16>, vector<32x256xf32> -> vector<32x256xf32>
    %c0_3 = arith.constant 0 : index
    %c0_4 = arith.constant 0 : index
    %9 = vector.load %arg3[%c0_3, %c0_4] : memref<1x256xf32, #tpu.memory_space<vmem>>, vector<1x256xf32>
    %10 = vector.broadcast %9 : vector<1x256xf32> to vector<32x256xf32>
    %11 = arith.addf %8, %10 : vector<32x256xf32>
    %cst_5 = arith.constant 0.000000e+00 : f32
    %12 = vector.broadcast %cst_5 : f32 to vector<32x256xf32>
    %13 = arith.maximumf %11, %12 : vector<32x256xf32>
    %c0_6 = arith.constant 0 : index
    %c0_7 = arith.constant 0 : index
    %14 = vector.load %arg4[%c0_6, %c0_7] : memref<32x256xf32, #tpu.memory_space<vmem>>, vector<32x256xf32>
    tpu.vector_store %arg4[%c0_6, %c0_7], %13 {strides = array<i32>} : memref<32x256xf32, #tpu.memory_space<vmem>>, vector<32x256xf32>,
    return
  }
  func.func @transform_0(%arg0: i32) -> (i32, i32) {
    %c0_i32 = arith.constant 0 : i32
    %c0_i32_0 = arith.constant 0 : i32
    return %arg0, %c0_i32 : i32, i32
  }
  func.func @transform_1(%arg0: i32) -> (i32, i32) {
    %c0_i32 = arith.constant 0 : i32
    %c0_i32_0 = arith.constant 0 : i32
    %c0_i32_1 = arith.constant 0 : i32
    return %c0_i32, %c0_i32_0 : i32, i32
  }
  func.func @transform_2(%arg0: i32) -> (i32, i32) {
    %c0_i32 = arith.constant 0 : i32
    %c0_i32_0 = arith.constant 0 : i32
    %c0_i32_1 = arith.constant 0 : i32
    return %c0_i32, %c0_i32_0 : i32, i32
  }
  func.func @transform_3(%arg0: i32) -> (i32, i32) {
    %c0_i32 = arith.constant 0 : i32
    %c0_i32_0 = arith.constant 0 : i32
    return %arg0, %c0_i32 : i32, i32
  }
}

</mosaic_0001>

<llo_original>
// kernel: tpu_custom_call.1
$region0: #{tpu_custom_call.1}
  #allocation0 [shape = 'u32[]', space=smem, size = 0x4, offset = 0x4, fixed_abs, tag = 'smem constant byte address 0x4 - core index']
  #allocation1 [shape = 'u32[144,128]{1,0:T(1,128)}', space=vmem, size = 0x12000, scoped, tag = 'internal scratch']
  %s0 = inlined_call_operand.vmem [shape: s32[32,1], index: 0, kind: input, shape index: {}]
  %s1 = inlined_call_operand.vmem [shape: bf16[32,256], index: 1, kind: input, shape index: {}]
  %s2 = inlined_call_operand.vmem [shape: f32[1,256], index: 2, kind: input, shape index: {}]
  %s3 = inlined_call_operand.hbm [shape: f32[32,256], index: 3, kind: output, shape index: {}]
  %s4 = sld [smem:[#allocation0]]
  $region22: #{tpu_custom_call.1} parent=0
    _
  %s6 = ssub.s32 1, %s4
  %s7 = scalar_select 0, %s6, %s4
  $region1: #{tpu_custom_call.1} parent=0
    #allocation2 [shape = 'u8[32768]{0}', space=vmem, size = 0x8000, scoped, tag = 'output window, operand 0, single buffered']
    #allocation3 [shape = 's32[1]{0}', space=sflag, size = 0x4, scoped, tag = 'scoped memory for tpu_custom_call.1']
    %8 = vsyncpa [#allocation3], 0
    // Predicated region
    $region2: #{tpu_custom_call.1} parent=1 // pred_check
      _
    $region3: #{tpu_custom_call.1} parent=1 // pred_check_branch
      %10 = sbr.rel (0) target = $region5
    $region4: #{tpu_custom_call.1} parent=1 // pred_region
      _
    $region5: #{tpu_custom_call.1} parent=1 // pred_fallthru
      _
    // Predicated region
    $region6: #{tpu_custom_call.1} parent=1 // pred_check
      _
    $region7: #{tpu_custom_call.1} parent=1 // pred_check_branch
      %12 = sbr.rel (0) target = $region9
    $region8: #{tpu_custom_call.1} parent=1 // pred_region
      _
    $region9: #{tpu_custom_call.1} parent=1 // pred_fallthru
      _
    // Predicated region
    $region10: #{tpu_custom_call.1} parent=1 // pred_check
      _
    $region11: #{tpu_custom_call.1} parent=1 // pred_check_branch
      %14 = sbr.rel (0) target = $region13
    $region12: #{tpu_custom_call.1} parent=1 // pred_region
      _
    $region13: #{tpu_custom_call.1} parent=1 // pred_fallthru
      _
    %v16 = vld [vmem:[%s0] sm:$0xff]
    %v17 = vld [vmem:[%s0 + $0x8] sm:$0xff]
    %v18 = vld [vmem:[%s0 + $0x10] sm:$0xff]
    %v19 = vld [vmem:[%s0 + $0x18] sm:$0xff]
    %v20 = vlaneseq
    %v21 = vand.u32 %v20, 127
    %22 = vset.pattern.permute.xlu0 0
    %23 = vperm.xlu0 %22, %v16
    %v24 = vpop.permute.xlu0 %23
    %25 = vset.pattern.permute.xlu0 0
    %26 = vperm.xlu0 %25, %v17
    %v27 = vpop.permute.xlu0 %26
    %28 = vset.pattern.permute.xlu0 0
    %29 = vperm.xlu0 %28, %v18
    %v30 = vpop.permute.xlu0 %29
    %31 = vset.pattern.permute.xlu0 0
    %32 = vperm.xlu0 %31, %v19
    %v33 = vpop.permute.xlu0 %32
    %vm34 = vcmp.eq.s32.totalorder %v21, %v24
    %vm35 = vcmp.eq.s32.totalorder %v21, %v27
    %vm36 = vcmp.eq.s32.totalorder %v21, %v30
    %vm37 = vcmp.eq.s32.totalorder %v21, %v33
    %v38 = vsel %vm34, 1, 0
    %v39 = vsel %vm35, 1, 0
    %v40 = vsel %vm36, 1, 0
    %v41 = vsel %vm37, 1, 0
    %v42 = vcvt.s32.f32 %v38
    %v43 = vcvt.s32.f32 %v39
    %v44 = vcvt.s32.f32 %v40
    %v45 = vcvt.s32.f32 %v41
    %v46 = vpack.c.bf16 %v43, %v42
    %v47 = vpack.c.bf16 %v45, %v44
    %v48 = vld [vmem:[%s1] sm:$0xff]
    %v49 = vld [vmem:[%s1 + $0x8] sm:$0xff]
    %v50 = vld [vmem:[%s1 + $0x10] sm:$0xff]
    %v51 = vld [vmem:[%s1 + $0x18] sm:$0xff]
    %v52 = vld [vmem:[%s2] sm:$0x3]
    %v54 = vlaneseq
    %v55 = vshrl.u32 %v54, 7
    %v56 = vsub.s32 0, %v55
    %v57 = vrot.slane %v52, %v56
    %v58 = vlaneseq
    %v59 = vshrl.u32 %v58, 7
    %v60 = vsub.s32 1, %v59
    %v61 = vrot.slane %v52, %v60
    %v68 = vunpack.c.l.b16 %v48
    %v69 = vunpack.c.h.b16 %v48
    %v70 = vunpack.c.l.b16 %v49
    %v71 = vunpack.c.h.b16 %v49
    %v72 = vunpack.c.l.b16 %v50
    %v73 = vunpack.c.h.b16 %v50
    %v74 = vunpack.c.l.b16 %v51
    %v75 = vunpack.c.h.b16 %v51
    %v76 = vpack.c.b16 %v70, %v68
    %v77 = vpack.c.b16 %v71, %v69
    %v78 = vpack.c.b16 %v74, %v72
    %v79 = vpack.c.b16 %v75, %v73
    %vm84 = vcmask 261120
    %v86 = vsel %vm84, %v46, 0
    %v89 = vsel %vm84, %v47, 0
    %91 = vmatprep.subr.bf16.mxu0 %v77
    %92 = vmatpush1.bf16.msra.mxu0 %v76
    %93 = vmatprep.subr.bf16.mxu0 %v79
    %94 = vmatpush1.bf16.msra.mxu0 %v78
    %95 = vmatprep.subr.bf16.mxu0 0
    %96 = vmatpush1.bf16.msra.mxu0 0
    %97 = vmatprep.subr.bf16.mxu0 0
    %98 = vmatpush1.bf16.msra.mxu0 0
    %99 = vmatprep.subr.bf16.mxu0 0
    %100 = vmatpush1.bf16.msra.mxu0 0
    %101 = vmatprep.subr.bf16.mxu0 0
    %102 = vmatpush1.bf16.msra.mxu0 0
    %103 = vmatprep.subr.bf16.mxu0 0
    %104 = vmatpush1.bf16.msra.mxu0 0
    %105 = vmatprep.subr.bf16.mxu0 0
    %106 = vmatpush1.bf16.msra.mxu0 0
    %107 = vmatprep.subr.bf16.mxu0 0
    %108 = vmatpush1.bf16.msra.mxu0 0
    %109 = vmatprep.subr.bf16.mxu0 0
    %110 = vmatpush1.bf16.msra.mxu0 0
    %111 = vmatprep.subr.bf16.mxu0 0
    %112 = vmatpush1.bf16.msra.mxu0 0
    %113 = vmatprep.subr.bf16.mxu0 0
    %114 = vmatpush1.bf16.msra.mxu0 0
    %115 = vmatprep.subr.bf16.mxu0 0
    %116 = vmatpush1.bf16.msra.mxu0 0
    %117 = vmatprep.subr.bf16.mxu0 0
    %118 = vmatpush1.bf16.msra.mxu0 0
    %119 = vmatprep.subr.bf16.mxu0 0
    %120 = vmatpush1.bf16.msra.mxu0 0
    %121 = vmatprep.subr.bf16.mxu0 0
    %122 = vmatpush1.bf16.msra.mxu0 0
    %123 = vmatprep.mubr.bf16.mxu0 0
    %124 = vmatmul.mubr.bf16.gmra.mrb[0].mxu0 %v86
    %v125 = vpop.f32.mrb[0].mxu0
    %v126 = vadd.f32 %v57, %v125
    %v127 = vpop.f32.mrb[0].mxu0
    %v128 = vadd.f32 %v61, %v127
    %v129 = vpop.f32.mrb[0].mxu0
    %v130 = vadd.f32 %v57, %v129
    %v131 = vpop.f32.mrb[0].mxu0
    %v132 = vadd.f32 %v61, %v131
    %133 = vmatprep.mubr.bf16.mxu0 0
    %134 = vmatmul.mubr.bf16.gmra.mrb[0].mxu0 %v89
    %v135 = vpop.f32.mrb[0].mxu0
    %v136 = vadd.f32 %v57, %v135
    %v137 = vpop.f32.mrb[0].mxu0
    %v138 = vadd.f32 %v61, %v137
    %v139 = vpop.f32.mrb[0].mxu0
    %v140 = vadd.f32 %v57, %v139
    %v141 = vpop.f32.mrb[0].mxu0
    %v142 = vadd.f32 %v61, %v141
    %143 = vdwg.mxu0
    %v144 = vmax.f32 %v126, 0.0
    %v145 = vmax.f32 %v128, 0.0
    %v146 = vmax.f32 %v130, 0.0
    %v147 = vmax.f32 %v132, 0.0
    %v148 = vmax.f32 %v136, 0.0
    %v149 = vmax.f32 %v138, 0.0
    %v150 = vmax.f32 %v140, 0.0
    %v151 = vmax.f32 %v142, 0.0
    %152 = vst [vmem:[#allocation2] sm:$0xff] %v144
    %153 = vst [vmem:[#allocation2 + $0x8] sm:$0xff] %v145
    %154 = vst [vmem:[#allocation2 + $0x10] sm:$0xff] %v146
    %155 = vst [vmem:[#allocation2 + $0x18] sm:$0xff] %v147
    %156 = vst [vmem:[#allocation2 + $0x20] sm:$0xff] %v148
    %157 = vst [vmem:[#allocation2 + $0x28] sm:$0xff] %v149
    %158 = vst [vmem:[#allocation2 + $0x30] sm:$0xff] %v150
    %159 = vst [vmem:[#allocation2 + $0x38] sm:$0xff] %v151
    // Predicated region
    $region14: #{tpu_custom_call.1} parent=1 // pred_check
      _
    $region15: #{tpu_custom_call.1} parent=1 // pred_check_branch
      %161 = sbr.rel (0) target = $region17
    $region16: #{tpu_custom_call.1} parent=1 // pred_region
      %s163 = ssub.s32 1024, 1024
      %164 = vsyncadd [#allocation3], %s163
      %s165 = sshll.u32 [#allocation2], 4
      %s166 = int_to_ptr.vmem [resolvable:$true] %s165
      %171 = dma.vmem_to_hbm [thread:$0]  %s166, 1024, %s3, [#allocation3], 256, 256, 16
    $region17: #{tpu_custom_call.1} parent=1 // pred_fallthru
      _
    // Predicated region
    $region18: #{tpu_custom_call.1} parent=1 // pred_check
      _
    $region19: #{tpu_custom_call.1} parent=1 // pred_check_branch
      %173 = sbr.rel (0) target = $region21
    $region20: #{tpu_custom_call.1} parent=1 // pred_region
      %174 = dma.done [#allocation3], 1024
    $region21: #{tpu_custom_call.1} parent=1 // pred_fallthru
      _
    %175 = vsyncpa [#allocation3], 1

</llo_original>
